<compile_context>
chip_gen: v6e
topology: v6e:2x2x1
jax: 0.10.0
libtpu: 0.0.40
codegen_flags: <defaults>
</compile_context>

<pallas_src>
import functools

import jax
import jax.numpy as jnp
from jax import lax
from jax.experimental import pallas as pl
from jax.experimental.pallas import tpu as pltpu


def _round_up(x, m):
    return ((x + m - 1) // m) * m


def _cdiv(a, b):
    return (a + b - 1) // b


@functools.lru_cache(maxsize=1)
def _device_kind():
    try:
        return jax.devices()[0].device_kind.lower()
    except Exception:
        return ""


@functools.lru_cache(maxsize=1)
def _vmem_capacity_bytes():
    try:
        cap = getattr(pltpu.get_tpu_info(), "vmem_capacity_bytes", None)
        if cap:
            return int(cap)
    except Exception:
        pass
    kind = _device_kind()
    if "v5" in kind or "v6" in kind:
        return 128 * 1024 * 1024
    return 64 * 1024 * 1024          # conservative default (v7x / unknown)


@functools.lru_cache(maxsize=1)
def _budgets():
    """(per-tile byte budget, scoped VMEM limit) gated by chip VMEM capacity."""
    if _vmem_capacity_bytes() >= 100 * 1024 * 1024:      # v5e / v6e: 128 MiB
        return 8 * 1024 * 1024, 64 * 1024 * 1024
    return 4 * 1024 * 1024, 32 * 1024 * 1024             # v7x: 64 MiB physical


def _is_v5():
    return "v5" in _device_kind()


def _compute_dtype(x_dtype):
    # v6e / v7x VPUs are bf16-native -> stay in bf16 (halves vreg traffic).
    # v5e has no bf16 VPU -> upcast to f32 there.
    if x_dtype == jnp.bfloat16 and not _is_v5():
        return jnp.bfloat16
    return jnp.float32


def _choose_tile(B, D, itemsize):
    """Batch-tile rows: multiple of 8 sublanes, sized by dtype vs. byte budget."""
    tile_bytes, _ = _budgets()
    rows_fit = max(8, (tile_bytes // max(D * itemsize, 1)) // 8 * 8)
    return min(rows_fit, _round_up(B, 8))


# ----------------------------------------------------------------------------
# Kernel 1: data-dependent initialization (first forward call of the module).
# Accumulates shifted per-sublane partial sums / sums-of-squares into the
# per-core (8, D) output blocks; finalization happens in the wrapper.
# ----------------------------------------------------------------------------
def _actnorm_init_kernel(x_ref, x0_ref, sum_ref, ssq_ref, *, batch, tm, tpc):
    c = pl.program_id(0)       # core (parallel) axis
    i = pl.program_id(1)       # batch-tile (reduction, "arbitrary") axis

    @pl.when(i == 0)
    def _init():
        sum_ref[...] = jnp.zeros_like(sum_ref)
        ssq_ref[...] = jnp.zeros_like(ssq_ref)

    # Mask rows past the true batch: partial / clamped-duplicate blocks read
    # unspecified data and must not pollute the sums.
    start = (c * tpc + i) * tm
    row = lax.broadcasted_iota(jnp.int32, (tm, 1), 0)
    valid = row < (batch - start)

    # Shifted moments (shift = x[0]) to avoid catastrophic cancellation.
    xc = x_ref[...].astype(jnp.float32) - x0_ref[...]     # (TM, D)
    xc = jnp.where(valid, xc, 0.0)

    # Per-sublane partials: (TM, D) -> (TM//8, 8, D) -> sum over axis 0 -> (8, D).
    xr = xc.reshape(tm // 8, 8, xc.shape[-1])
    sum_ref[...] += jnp.sum(xr, axis=0)
    ssq_ref[...] += jnp.sum(xr * xr, axis=0)


def actnorm_initialize(x):
    """Data-dependent init: weight = log(1/(std0+1e-12)), bias = mean0; (1, D) f32."""
    B, D = x.shape
    itemsize = jnp.dtype(x.dtype).itemsize
    TM = _choose_tile(B, D, itemsize)
    tiles = _cdiv(B, TM)
    NC = 2 if tiles >= 2 else 1          # split the reduction across both TCs (v7x)
    tpc = _cdiv(tiles, NC)
    _, vmem_limit = _budgets()

    x0 = x[0:1, :].astype(jnp.float32)   # (1, D) shift, tiny

    def x_map(c, i):
        t = c * tpc + i
        return (jnp.minimum(t, tiles - 1), 0)     # clamp dummy (fully-OOB) tiles

    kernel = functools.partial(_actnorm_init_kernel, batch=B, tm=TM, tpc=tpc)
    sums, ssqs = pl.pallas_call(
        kernel,
        grid=(NC, tpc),
        out_shape=(
            jax.ShapeDtypeStruct((NC * 8, D), jnp.float32),
            jax.ShapeDtypeStruct((NC * 8, D), jnp.float32),
        ),
        in_specs=[
            pl.BlockSpec((TM, D), x_map),
            pl.BlockSpec((1, D), lambda c, i: (0, 0)),    # x0: resident
        ],
        out_specs=(
            pl.BlockSpec((8, D), lambda c, i: (c, 0)),    # per-core partial sums
            pl.BlockSpec((8, D), lambda c, i: (c, 0)),    # per-core partial ssq
        ),
        compiler_params=pltpu.CompilerParams(
            dimension_semantics=("parallel", "arbitrary"),
            vmem_limit_bytes=vmem_limit,
        ),
    )(x, x0)

    # Tiny (NC*8, D) finalize in plain XLA.
    n = jnp.float32(B)
    s = jnp.sum(sums, axis=0, keepdims=True)              # (1, D)
    ss = jnp.sum(ssqs, axis=0, keepdims=True)
    mean_c = s / n
    # Unbiased variance (torch.std default, ddof=1).  B == 1 gives 0/0 = nan,
    # matching torch.std on a single sample.
    var = (ss - n * mean_c * mean_c) / (n - 1.0)
    std = jnp.sqrt(jnp.maximum(var, 0.0))
    weight = jnp.log(1.0 / (std + 1e-12))
    bias = x0 + mean_c
    return weight, bias


# ----------------------------------------------------------------------------
# Kernel 2: affine transform (shared by direct / inverse modes).
#   y = (x - shift) * scale, with scale/shift precomputed on the tiny params.
# ----------------------------------------------------------------------------
def _actnorm_fwd_kernel(x_ref, scale_ref, shift_ref, y_ref):
    s = scale_ref[...]                                    # (1, D), resident
    b = shift_ref[...]
    x = x_ref[...].astype(s.dtype)                        # (TM, D)
    y_ref[...] = ((x - b) * s).astype(y_ref.dtype)


def actnorm_forward(x, weight, bias, mode="direct"):
    """ActNorm forward.  weight/bias: (D,) or (1, D).  Returns (y, logdet (B,1))."""
    B, D = x.shape
    itemsize = jnp.dtype(x.dtype).itemsize
    TM = _choose_tile(B, D, itemsize)
    _, vmem_limit = _budgets()
    cdt = _compute_dtype(x.dtype)

    w = jnp.reshape(weight, (1, D)).astype(jnp.float32)
    b = jnp.reshape(bias, (1, D)).astype(jnp.float32)
    if mode == "direct":
        scale = jnp.exp(w)                 # y = (x - bias) * exp(w)
        shift = b
        ld = jnp.sum(w)
    else:
        scale = jnp.exp(-w)                # y = x*exp(-w) + bias = (x - shift)*scale
        shift = -b * jnp.exp(w)
        ld = -jnp.sum(w)

    y = pl.pallas_call(
        _actnorm_fwd_kernel,
        grid=(_cdiv(B, TM),),
        out_shape=jax.ShapeDtypeStruct((B, D), x.dtype),
        in_specs=[
            pl.BlockSpec((TM, D), lambda i: (i, 0)),
            pl.BlockSpec((1, D), lambda i: (0, 0)),        # scale: resident
            pl.BlockSpec((1, D), lambda i: (0, 0)),        # shift: resident
        ],
        out_specs=pl.BlockSpec((TM, D), lambda i: (i, 0)),
        compiler_params=pltpu.CompilerParams(
            dimension_semantics=("parallel",),             # megacore-shardable
            vmem_limit_bytes=vmem_limit,
        ),
    )(x, scale.astype(cdt), shift.astype(cdt))

    # logdet is O(B) broadcast of a scalar: keep it out of the mem-bound kernel
    # (a (TM, 1) output would force masked vst.msk stores + an extra DMA stream).
    logdet = jnp.broadcast_to(ld.reshape(1, 1), (B, 1)).astype(jnp.float32)
    return y, logdet


# Pure-JAX reference of the PyTorch module (first call, then direct / inverse).
def actnorm_ref_first_call(x, mode="direct"):
    mean = jnp.mean(x, axis=0)
    std = jnp.std(x, axis=0, ddof=1)
    weight = jnp.log(1.0 / (std + 1e-12))
    bias = mean
    if mode == "direct":
        y = (x - bias) * jnp.exp(weight)
        ld = jnp.sum(weight)
    else:
        y = x * jnp.exp(-weight) + bias
        ld = -jnp.sum(weight)
    logdet = jnp.broadcast_to(ld, (x.shape[0], 1))
    return y, logdet


if __name__ == "__main__":
    B, D = 12, 32   # flat (batch, num_inputs); B not a multiple of 8 exercises masking

    key = jax.random.PRNGKey(0)
    x = jax.random.normal(key, (B, D), dtype=jnp.float32) * 2.0 + 0.5

    # __init__ params (weight = ones(D), bias = zeros(D)) are overwritten by the
    # data-dependent initialization on the first forward call ...
    weight, bias = actnorm_initialize(x)
    # ... followed by the direct-mode transform.
    y, logdet = actnorm_forward(x, weight, bias, mode="direct")
    y = jax.block_until_ready(y)
    logdet = jax.block_until_ready(logdet)

    y_ref, logdet_ref = actnorm_ref_first_call(x, mode="direct")
    assert y.shape == (B, D) and logdet.shape == (B, 1)
    assert jnp.allclose(y, y_ref, atol=1e-5, rtol=1e-5)
    assert jnp.allclose(logdet, logdet_ref, atol=1e-5, rtol=1e-5)

    # Inverse mode should round-trip and negate the logdet.
    x_rec, logdet_inv = actnorm_forward(y, weight, bias, mode="inverse")
    x_rec = jax.block_until_ready(x_rec)
    assert jnp.allclose(x_rec, x, atol=1e-5, rtol=1e-5)
    assert jnp.allclose(logdet_inv, -logdet_ref, atol=1e-5, rtol=1e-5)

    print("KERNEL_OK")
</pallas_src>

<mosaic_0001>
module attributes {stable_mosaic.version = 11 : i64} {
  func.func @_actnorm_init_kernel(%arg0: i32, %arg1: i32, %arg2: memref<16x32xf32, #tpu.memory_space<vmem>>, %arg3: memref<1x32xf32, #tpu.memory_space<vmem>>, %arg4: memref<8x32xf32, #tpu.memory_space<vmem>>, %arg5: memref<8x32xf32, #tpu.memory_space<vmem>>) attributes {dimension_semantics = [#tpu.dimension_semantics<parallel>, #tpu.dimension_semantics<arbitrary>], iteration_bounds = array<i64: 1, 1>, scalar_prefetch = 0 : i64, scratch_operands = 0 : i64, tpu.core_type = #tpu.core_type<tc>, window_params = [{transform_indices = @transform_0, window_bounds = array<i64: 16, 32>}, {pipeline_mode = #tpu.pipeline_mode<synchronous>, transform_indices = @transform_1, window_bounds = array<i64: 1, 32>}, {transform_indices = @transform_2, window_bounds = array<i64: 8, 32>}, {transform_indices = @transform_3, window_bounds = array<i64: 8, 32>}]} {
    %c0_i32 = arith.constant 0 : i32
    %0 = arith.cmpi eq, %arg1, %c0_i32 : i32
    %1 = arith.extui %0 : i1 to i32
    %c0_i32_0 = arith.constant 0 : i32
    %2 = arith.cmpi ne, %1, %c0_i32_0 : i32
    scf.if %2 {
      %cst_14 = arith.constant 0.000000e+00 : f32
      %28 = vector.broadcast %cst_14 : f32 to vector<8x32xf32>
      %c0_15 = arith.constant 0 : index
      %c0_16 = arith.constant 0 : index
      %29 = vector.load %arg4[%c0_15, %c0_16] : memref<8x32xf32, #tpu.memory_space<vmem>>, vector<8x32xf32>
      tpu.vector_store %arg4[%c0_15, %c0_16], %28 {strides = array<i32>} : memref<8x32xf32, #tpu.memory_space<vmem>>, vector<8x32xf32>,
      %cst_17 = arith.constant 0.000000e+00 : f32
      %30 = vector.broadcast %cst_17 : f32 to vector<8x32xf32>
      %c0_18 = arith.constant 0 : index
      %c0_19 = arith.constant 0 : index
      %31 = vector.load %arg5[%c0_18, %c0_19] : memref<8x32xf32, #tpu.memory_space<vmem>>, vector<8x32xf32>
      tpu.vector_store %arg5[%c0_18, %c0_19], %30 {strides = array<i32>} : memref<8x32xf32, #tpu.memory_space<vmem>>, vector<8x32xf32>,
    } else {
    }
    %c1_i32 = arith.constant 1 : i32
    %3 = arith.muli %arg0, %c1_i32 : i32
    %4 = arith.addi %3, %arg1 : i32
    %c16_i32 = arith.constant 16 : i32
    %5 = arith.muli %4, %c16_i32 : i32
    %6 = tpu.iota {dimensions = array<i32: 0>} : vector<16x1xi32>
    %c12_i32 = arith.constant 12 : i32
    %7 = arith.subi %c12_i32, %5 : i32
    %8 = vector.broadcast %7 : i32 to vector<16x1xi32>
    %9 = arith.cmpi slt, %6, %8 : vector<16x1xi32>
    %c0 = arith.constant 0 : index
    %c0_1 = arith.constant 0 : index
    %10 = vector.load %arg2[%c0, %c0_1] : memref<16x32xf32, #tpu.memory_space<vmem>>, vector<16x32xf32>
    %c0_2 = arith.constant 0 : index
    %c0_3 = arith.constant 0 : index
    %11 = vector.load %arg3[%c0_2, %c0_3] : memref<1x32xf32, #tpu.memory_space<vmem>>, vector<1x32xf32>
    %12 = vector.broadcast %11 : vector<1x32xf32> to vector<16x32xf32>
    %13 = arith.subf %10, %12 : vector<16x32xf32>
    %cst = arith.constant 0.000000e+00 : f32
    %14 = vector.shape_cast %9 : vector<16x1xi1> to vector<16x1xi1>
    %15 = vector.broadcast %14 : vector<16x1xi1> to vector<16x32xi1>
    %16 = vector.broadcast %cst : f32 to vector<16x32xf32>
    %17 = arith.select %15, %13, %16 : vector<16x32xi1>, vector<16x32xf32>
    %18 = vector.shape_cast %17 : vector<16x32xf32> to vector<2x8x32xf32>
    %c0_4 = arith.constant 0 : index
    %c0_5 = arith.constant 0 : index
    %19 = vector.load %arg4[%c0_4, %c0_5] : memref<8x32xf32, #tpu.memory_space<vmem>>, vector<8x32xf32>
    %cst_6 = arith.constant dense<0.000000e+00> : vector<8x32xf32>
    %20 = vector.multi_reduction <add>, %18, %cst_6 [0] : vector<2x8x32xf32> to vector<8x32xf32>
    %21 = arith.addf %19, %20 : vector<8x32xf32>
    %c0_7 = arith.constant 0 : index
    %c0_8 = arith.constant 0 : index
    %22 = vector.load %arg4[%c0_7, %c0_8] : memref<8x32xf32, #tpu.memory_space<vmem>>, vector<8x32xf32>
    tpu.vector_store %arg4[%c0_7, %c0_8], %21 {strides = array<i32>} : memref<8x32xf32, #tpu.memory_space<vmem>>, vector<8x32xf32>,
    %c0_9 = arith.constant 0 : index
    %c0_10 = arith.constant 0 : index
    %23 = vector.load %arg5[%c0_9, %c0_10] : memref<8x32xf32, #tpu.memory_space<vmem>>, vector<8x32xf32>
    %24 = arith.mulf %18, %18 : vector<2x8x32xf32>
    %cst_11 = arith.constant dense<0.000000e+00> : vector<8x32xf32>
    %25 = vector.multi_reduction <add>, %24, %cst_11 [0] : vector<2x8x32xf32> to vector<8x32xf32>
    %26 = arith.addf %23, %25 : vector<8x32xf32>
    %c0_12 = arith.constant 0 : index
    %c0_13 = arith.constant 0 : index
    %27 = vector.load %arg5[%c0_12, %c0_13] : memref<8x32xf32, #tpu.memory_space<vmem>>, vector<8x32xf32>
    tpu.vector_store %arg5[%c0_12, %c0_13], %26 {strides = array<i32>} : memref<8x32xf32, #tpu.memory_space<vmem>>, vector<8x32xf32>,
    return
  }
  func.func @transform_0(%arg0: i32, %arg1: i32) -> (i32, i32) {
    %c1_i32 = arith.constant 1 : i32
    %0 = arith.muli %arg0, %c1_i32 : i32
    %1 = arith.addi %0, %arg1 : i32
    %c0_i32 = arith.constant 0 : i32
    %2 = arith.minsi %1, %c0_i32 : i32
    %c0_i32_0 = arith.constant 0 : i32
    %c0_i32_1 = arith.constant 0 : i32
    return %2, %c0_i32_0 : i32, i32
  }
  func.func @transform_1(%arg0: i32, %arg1: i32) -> (i32, i32) {
    %c0_i32 = arith.constant 0 : i32
    %c0_i32_0 = arith.constant 0 : i32
    %c0_i32_1 = arith.constant 0 : i32
    return %c0_i32, %c0_i32_0 : i32, i32
  }
  func.func @transform_2(%arg0: i32, %arg1: i32) -> (i32, i32) {
    %c0_i32 = arith.constant 0 : i32
    %c0_i32_0 = arith.constant 0 : i32
    return %arg0, %c0_i32 : i32, i32
  }
  func.func @transform_3(%arg0: i32, %arg1: i32) -> (i32, i32) {
    %c0_i32 = arith.constant 0 : i32
    %c0_i32_0 = arith.constant 0 : i32
    return %arg0, %c0_i32 : i32, i32
  }
}

</mosaic_0001>

<llo_original>
// kernel: tpu_custom_call.1
$region0: #{tpu_custom_call.1}
  #allocation0 [shape = 'u32[]', space=smem, size = 0x4, offset = 0x4, fixed_abs, tag = 'smem constant byte address 0x4 - core index']
  #allocation1 [shape = 'u32[144,128]{1,0:T(1,128)}', space=vmem, size = 0x12000, scoped, tag = 'internal scratch']
  %s0 = inlined_call_operand.hbm [shape: f32[12,32], index: 0, kind: input, shape index: {}]
  %s1 = inlined_call_operand.vmem [shape: f32[1,32], index: 1, kind: input, shape index: {}]
  %s2 = inlined_call_operand.hbm [shape: f32[8,32], index: 2, kind: output, shape index: {0}]
  %s3 = inlined_call_operand.hbm [shape: f32[8,32], index: 3, kind: output, shape index: {1}]
  %4 = xla_tuple %s2, %s3
  %s5 = sld [smem:[#allocation0]]
  $region34: #{tpu_custom_call.1} parent=0
    _
  %s7 = ssub.s32 1, %s5
  %s8 = scalar_select 0, %s7, %s5
  $region1: #{tpu_custom_call.1} parent=0
    #allocation2 [shape = 'u8[8192]{0}', space=vmem, size = 0x2000, scoped, tag = 'input window, operand 0, single buffered']
    #allocation3 [shape = 's32[1]{0}', space=sflag, size = 0x4, scoped, tag = 'scoped memory for tpu_custom_call.1']
    #allocation4 [shape = 's32[1]{0}', space=sflag, size = 0x4, scoped, tag = 'scoped memory for tpu_custom_call.1']
    #allocation5 [shape = 'u8[4096]{0}', space=vmem, size = 0x1000, scoped, tag = 'output window, operand 0, single buffered']
    #allocation6 [shape = 'u8[4096]{0}', space=vmem, size = 0x1000, scoped, tag = 'output window, operand 1, single buffered']
    #allocation7 [shape = 's32[1]{0}', space=sflag, size = 0x4, scoped, tag = 'scoped memory for tpu_custom_call.1']
    %9 = vsyncpa [#allocation3], 0
    %10 = vsyncpa [#allocation4], 0
    %11 = vsyncpa [#allocation7], 0
    // Predicated region
    $region2: #{tpu_custom_call.1} parent=1 // pred_check
      _
    $region3: #{tpu_custom_call.1} parent=1 // pred_check_branch
      %13 = sbr.rel (0) target = $region5
    $region4: #{tpu_custom_call.1} parent=1 // pred_region
      %s14 = sadd.s32 0, 0
      %p15 = scmp.lt.s32.totalorder %s14, 0
      %s16 = scalar_select %p15, %s14, 0
      %s17 = smul.u32 2, %s16
      %s19 = ssub.s32 256, 256
      %20 = vsyncadd [#allocation3], %s19
      %s21 = smul.addr %s17, 128
      %s22 = scalar_lea.hbm %s0, %s21
      %s23 = sshll.u32 [#allocation2], 4
      %s24 = int_to_ptr.vmem [resolvable:$true] %s23
      %29 = dma.hbm_to_vmem [thread:$0]  %s22, 256, %s24, [#allocation3], 128, 128, 8
    $region5: #{tpu_custom_call.1} parent=1 // pred_fallthru
      _
    // Predicated region
    $region6: #{tpu_custom_call.1} parent=1 // pred_check
      _
    $region7: #{tpu_custom_call.1} parent=1 // pred_check_branch
      %31 = sbr.rel (0) target = $region9
    $region8: #{tpu_custom_call.1} parent=1 // pred_region
      _
    $region9: #{tpu_custom_call.1} parent=1 // pred_fallthru
      _
    // Predicated region
    $region10: #{tpu_custom_call.1} parent=1 // pred_check
      _
    $region11: #{tpu_custom_call.1} parent=1 // pred_check_branch
      %33 = sbr.rel (0) target = $region13
    $region12: #{tpu_custom_call.1} parent=1 // pred_region
      %34 = dma.done [#allocation3], 256
    $region13: #{tpu_custom_call.1} parent=1 // pred_fallthru
      _
    %s35 = sadd.s32 0, 0
    %p36 = scmp.lt.s32.totalorder %s35, 0
    %s37 = scalar_select %p36, %s35, 0
    %s38 = smul.u32 2, %s37
    %p39 = scmp.eq.s32.totalorder 0, 0
    // Predicated region
    $region14: #{tpu_custom_call.1} parent=1 // pred_check
      %p40 = pneg %p39
    $region15: #{tpu_custom_call.1} parent=1 // pred_check_branch
      %42 = sbr.rel (%p40) target = $region17
    $region16: #{tpu_custom_call.1} parent=1 // pred_region
      %vm43 = vcmask 261120
      %44 = vst.msk [vmem:[#allocation5] sm:$0xff] %vm43, 0.0
      %45 = vst.msk [vmem:[#allocation6] sm:$0xff] %vm43, 0.0
    $region17: #{tpu_custom_call.1} parent=1 // pred_fallthru
      _
    %s46 = sadd.s32 0, 0
    %s47 = smul.u32 %s46, 16
    %v48 = vlaneseq
    %v49 = vshrl.u32 %v48, 7
    %v50 = vadd.s32 %v49, 8
    %s51 = ssub.s32 12, %s47
    %v52 = vstv %s51
    %vm53 = vcmp.lt.s32.totalorder %v49, %v52
    %vm54 = vcmp.lt.s32.totalorder %v50, %v52
    %v55 = vld [vmem:[#allocation2] sm:$0xff]
    %v56 = vld [vmem:[#allocation2 + $0x8] sm:$0xff]
    %v57 = vld [vmem:[%s1] sm:$0x1]
    %v59 = vlaneseq
    %v60 = vshrl.u32 %v59, 7
    %v61 = vsub.s32 0, %v60
    %v62 = vrot.slane %v57, %v61
    %v64 = vsub.f32 %v55, %v62
    %v65 = vsub.f32 %v56, %v62
    %v66 = vsel %vm53, 1, 0
    %v67 = vsel %vm54, 1, 0
    %vm68 = vcmp.eq.s32.totalorder %v66, 1
    %vm69 = vcmp.eq.s32.totalorder %v67, 1
    %v70 = vsel %vm68, %v64, 0.0
    %v71 = vsel %vm69, %v65, 0.0
    %v72 = vld [vmem:[#allocation5] sm:$0xff]
    %vm73 = vcmask 261120
    %v74 = vsel %vm73, %v70, 0.0
    %v75 = vsel %vm73, %v71, 0.0
    %v76 = vadd.f32 %v74, %v75
    %v77 = vadd.f32 %v72, %v76
    %78 = vst.msk [vmem:[#allocation5] sm:$0xff] %vm73, %v77
    %v79 = vld [vmem:[#allocation6] sm:$0xff]
    %v80 = vmul.f32 %v70, %v70
    %v81 = vmul.f32 %v71, %v71
    %v82 = vsel %vm73, %v80, 0.0
    %v83 = vsel %vm73, %v81, 0.0
    %v84 = vadd.f32 %v82, %v83
    %v85 = vadd.f32 %v79, %v84
    %86 = vst.msk [vmem:[#allocation6] sm:$0xff] %vm73, %v85
    // Predicated region
    $region18: #{tpu_custom_call.1} parent=1 // pred_check
      _
    $region19: #{tpu_custom_call.1} parent=1 // pred_check_branch
      %88 = sbr.rel (0) target = $region21
    $region20: #{tpu_custom_call.1} parent=1 // pred_region
      %s90 = ssub.s32 128, 128
      %91 = vsyncadd [#allocation4], %s90
      %s93 = sshll.u32 [#allocation5], 4
      %s94 = int_to_ptr.vmem [resolvable:$true] %s93
      %96 = dma.vmem_to_hbm [thread:$0]  %s94, 128, %s2, [#allocation4]
    $region21: #{tpu_custom_call.1} parent=1 // pred_fallthru
      _
    // Predicated region
    $region22: #{tpu_custom_call.1} parent=1 // pred_check
      _
    $region23: #{tpu_custom_call.1} parent=1 // pred_check_branch
      %98 = sbr.rel (0) target = $region25
    $region24: #{tpu_custom_call.1} parent=1 // pred_region
      %s100 = ssub.s32 128, 128
      %101 = vsyncadd [#allocation7], %s100
      %s103 = sshll.u32 [#allocation6], 4
      %s104 = int_to_ptr.vmem [resolvable:$true] %s103
      %106 = dma.vmem_to_hbm [thread:$0]  %s104, 128, %s3, [#allocation7]
    $region25: #{tpu_custom_call.1} parent=1 // pred_fallthru
      _
    // Predicated region
    $region26: #{tpu_custom_call.1} parent=1 // pred_check
      _
    $region27: #{tpu_custom_call.1} parent=1 // pred_check_branch
      %108 = sbr.rel (0) target = $region29
    $region28: #{tpu_custom_call.1} parent=1 // pred_region
      %109 = dma.done [#allocation4], 128
    $region29: #{tpu_custom_call.1} parent=1 // pred_fallthru
      _
    // Predicated region
    $region30: #{tpu_custom_call.1} parent=1 // pred_check
      _
    $region31: #{tpu_custom_call.1} parent=1 // pred_check_branch
      %111 = sbr.rel (0) target = $region33
    $region32: #{tpu_custom_call.1} parent=1 // pred_region
      %112 = dma.done [#allocation7], 128
    $region33: #{tpu_custom_call.1} parent=1 // pred_fallthru
      _
    %113 = vsyncpa [#allocation3], 1
    %114 = vsyncpa [#allocation4], 1
    %115 = vsyncpa [#allocation7], 1

</llo_original>
